<compile_context>
chip_gen: v7x
topology: tpu7x:2x2x1
jax: 0.10.0
libtpu: 0.0.40
codegen_flags: <defaults>
</compile_context>

<pallas_src>
import functools

import jax
import jax.numpy as jnp
from jax.experimental import pallas as pl
from jax.experimental.pallas import tpu as pltpu


def _round_up(x: int, m: int) -> int:
    return ((x + m - 1) // m) * m


def _iou_loss_rows(boxes):
    """boxes: (8, TN) packed tile -> per-box loss (1, TN)."""
    p_xmin, p_ymin, p_xmax, p_ymax = (boxes[i:i + 1, :] for i in range(4))
    g_xmin, g_ymin, g_xmax, g_ymax = (boxes[i:i + 1, :] for i in range(4, 8))

    xmin_inter = jnp.maximum(g_xmin, p_xmin)
    ymin_inter = jnp.maximum(g_ymin, p_ymin)
    xmax_inter = jnp.minimum(g_xmax, p_xmax)
    ymax_inter = jnp.minimum(g_ymax, p_ymax)

    w_inter = jnp.maximum(xmax_inter - xmin_inter, 0.0)
    h_inter = jnp.maximum(ymax_inter - ymin_inter, 0.0)
    inter_area = w_inter * h_inter

    gt_area = (g_xmax - g_xmin) * (g_ymax - g_ymin)
    pred_area = (p_xmax - p_xmin) * (p_ymax - p_ymin)
    union_area = gt_area + pred_area - inter_area

    # Matches the reference exactly (no eps clamp): union == 0 -> inf/NaN,
    # same as the PyTorch module.
    iou = inter_area / union_area
    return 1.0 - iou                                   # (1, TN)


def _iou_loss_none_kernel(boxes_ref, loss_ref):
    loss_ref[...] = _iou_loss_rows(boxes_ref[...])


def _iou_loss_partial_kernel(boxes_ref, part_ref):
    loss = _iou_loss_rows(boxes_ref[...])              # (1, TN)
    s = jnp.sum(loss)                                  # this tile's partial sum
    part_ref[...] = jnp.full((1, 128), s, dtype=jnp.float32)


@functools.partial(jax.jit, static_argnames=("reduction", "tile_n"))
def _iou_loss_impl(pred_box, gt_box, *, reduction="mean", tile_n=2048):
    n = pred_box.shape[0]
    assert pred_box.shape == gt_box.shape == (n, 4)
    assert reduction in ("none", "sum", "mean")

    # Lane tile: as large as allowed (kernel is HBM/overhead-bound), multiple
    # of 128, never larger than the 128-padded problem itself.
    tile = max(128, min(int(tile_n), _round_up(n, 128)))
    n_pad = _round_up(n, tile)
    grid = n_pad // tile

    # Fused (under jit) transpose + pad + stack into one (8, n_pad) slab.
    # TODO(synk): if the producer can emit coordinate-major boxes, this glue
    # (the only extra HBM round-trip) disappears entirely.
    pred_t = jnp.asarray(pred_box, jnp.float32).T      # (4, N)
    gt_t = jnp.asarray(gt_box, jnp.float32).T          # (4, N)
    if n_pad != n:
        pad = jnp.broadcast_to(
            jnp.array([0.0, 0.0, 1.0, 1.0], jnp.float32)[:, None],
            (4, n_pad - n))
        pred_t = jnp.concatenate([pred_t, pad], axis=1)
        gt_t = jnp.concatenate([gt_t, pad], axis=1)
    boxes = jnp.concatenate([pred_t, gt_t], axis=0)    # (8, n_pad)

    if reduction == "none":
        loss = pl.pallas_call(
            _iou_loss_none_kernel,
            out_shape=jax.ShapeDtypeStruct((1, n_pad), jnp.float32),
            grid_spec=pltpu.PrefetchScalarGridSpec(
                num_scalar_prefetch=0,
                grid=(grid,),
                in_specs=[pl.BlockSpec((8, tile), lambda i: (0, i))],
                out_specs=pl.BlockSpec((1, tile), lambda i: (0, i)),
            ),
            compiler_params=pltpu.CompilerParams(
                dimension_semantics=("parallel",)),
        )(boxes)
        return loss[0, :n]

    # 'sum' / 'mean': per-tile partial sums only (no per-box writeback).
    partials = pl.pallas_call(
        _iou_loss_partial_kernel,
        out_shape=jax.ShapeDtypeStruct((1, grid * 128), jnp.float32),
        grid_spec=pltpu.PrefetchScalarGridSpec(
            num_scalar_prefetch=0,
            grid=(grid,),
            in_specs=[pl.BlockSpec((8, tile), lambda i: (0, i))],
            out_specs=pl.BlockSpec((1, 128), lambda i: (0, i)),
        ),
        compiler_params=pltpu.CompilerParams(
            dimension_semantics=("parallel",)),
    )(boxes)

    total = jnp.sum(partials.reshape(grid, 128)[:, 0])
    if reduction == "sum":
        return total
    return total / jnp.float32(n)


def iou_loss(pred_box, gt_box, reduction: str = "mean", tile_n: int = 2048):
    """pred_box, gt_box: (N, 4) arrays, PyTorch convention [xmin,ymin,xmax,ymax]."""
    return _iou_loss_impl(pred_box, gt_box, reduction=reduction, tile_n=tile_n)


def _reference(pred_box, gt_box, reduction="mean"):
    xmin_i = jnp.maximum(gt_box[:, 0], pred_box[:, 0])
    ymin_i = jnp.maximum(gt_box[:, 1], pred_box[:, 1])
    xmax_i = jnp.minimum(gt_box[:, 2], pred_box[:, 2])
    ymax_i = jnp.minimum(gt_box[:, 3], pred_box[:, 3])
    w_i = jnp.clip(xmax_i - xmin_i, 0.0)
    h_i = jnp.clip(ymax_i - ymin_i, 0.0)
    inter = w_i * h_i
    gt_a = (gt_box[:, 2] - gt_box[:, 0]) * (gt_box[:, 3] - gt_box[:, 1])
    pr_a = (pred_box[:, 2] - pred_box[:, 0]) * (pred_box[:, 3] - pred_box[:, 1])
    union = gt_a + pr_a - inter
    loss = 1.0 - inter / union
    if reduction == "none":
        return loss
    if reduction == "sum":
        return jnp.sum(loss)
    return jnp.mean(loss)


if __name__ == "__main__":
    key = jax.random.PRNGKey(0)
    k1, k2, k3, k4 = jax.random.split(key, 4)

    N = 300  # deliberately NOT a multiple of 128 to exercise the padding path

    # Build valid boxes: [x, y, x+w, y+h]
    xy_p = jax.random.uniform(k1, (N, 2), jnp.float32, 0.0, 1.0)
    wh_p = jax.random.uniform(k2, (N, 2), jnp.float32, 0.2, 1.0)
    pred_box = jnp.concatenate([xy_p, xy_p + wh_p], axis=1)      # (N, 4)

    xy_g = jax.random.uniform(k3, (N, 2), jnp.float32, 0.0, 1.0)
    wh_g = jax.random.uniform(k4, (N, 2), jnp.float32, 0.2, 1.0)
    gt_box = jnp.concatenate([xy_g, xy_g + wh_g], axis=1)        # (N, 4)

    # Default (single large tile) paths.
    out_mean = jax.block_until_ready(iou_loss(pred_box, gt_box, "mean"))
    out_sum = jax.block_until_ready(iou_loss(pred_box, gt_box, "sum"))
    out_none = jax.block_until_ready(iou_loss(pred_box, gt_box, "none"))

    # Force a multi-tile grid to exercise the parallel partial-sum reduction.
    out_sum_mt = jax.block_until_ready(iou_loss(pred_box, gt_box, "sum", tile_n=128))
    out_none_mt = jax.block_until_ready(iou_loss(pred_box, gt_box, "none", tile_n=128))

    ref_mean = _reference(pred_box, gt_box, "mean")
    ref_sum = _reference(pred_box, gt_box, "sum")
    ref_none = _reference(pred_box, gt_box, "none")

    assert jnp.allclose(out_mean, ref_mean, rtol=1e-5, atol=1e-5)
    assert jnp.allclose(out_sum, ref_sum, rtol=1e-4, atol=1e-4)
    assert jnp.allclose(out_none, ref_none, rtol=1e-5, atol=1e-5)
    assert jnp.allclose(out_sum_mt, ref_sum, rtol=1e-4, atol=1e-4)
    assert jnp.allclose(out_none_mt, ref_none, rtol=1e-5, atol=1e-5)

    print("KERNEL_OK")
</pallas_src>

<mosaic_0001>
module attributes {stable_mosaic.version = 11 : i64} {
  func.func @_iou_loss_partial_kernel(%arg0: i32, %arg1: memref<8x384xf32, #tpu.memory_space<vmem>>, %arg2: memref<1x128xf32, #tpu.memory_space<vmem>>) attributes {dimension_semantics = [#tpu.dimension_semantics<parallel>], iteration_bounds = array<i64: 1>, scalar_prefetch = 0 : i64, scratch_operands = 0 : i64, tpu.core_type = #tpu.core_type<tc>, window_params = [{transform_indices = @transform_0, window_bounds = array<i64: 8, 384>}, {transform_indices = @transform_1, window_bounds = array<i64: 1, 128>}]} {
    %c0 = arith.constant 0 : index
    %c0_0 = arith.constant 0 : index
    %0 = vector.load %arg1[%c0, %c0_0] : memref<8x384xf32, #tpu.memory_space<vmem>>, vector<8x384xf32>
    %1 = vector.extract_strided_slice %0 {offsets = [0, 0], sizes = [1, 384], strides = [1, 1]} : vector<8x384xf32> to vector<1x384xf32>
    %2 = vector.extract_strided_slice %0 {offsets = [1, 0], sizes = [1, 384], strides = [1, 1]} : vector<8x384xf32> to vector<1x384xf32>
    %3 = vector.extract_strided_slice %0 {offsets = [2, 0], sizes = [1, 384], strides = [1, 1]} : vector<8x384xf32> to vector<1x384xf32>
    %4 = vector.extract_strided_slice %0 {offsets = [3, 0], sizes = [1, 384], strides = [1, 1]} : vector<8x384xf32> to vector<1x384xf32>
    %5 = vector.extract_strided_slice %0 {offsets = [4, 0], sizes = [1, 384], strides = [1, 1]} : vector<8x384xf32> to vector<1x384xf32>
    %6 = vector.extract_strided_slice %0 {offsets = [5, 0], sizes = [1, 384], strides = [1, 1]} : vector<8x384xf32> to vector<1x384xf32>
    %7 = vector.extract_strided_slice %0 {offsets = [6, 0], sizes = [1, 384], strides = [1, 1]} : vector<8x384xf32> to vector<1x384xf32>
    %8 = vector.extract_strided_slice %0 {offsets = [7, 0], sizes = [1, 384], strides = [1, 1]} : vector<8x384xf32> to vector<1x384xf32>
    %9 = arith.maximumf %5, %1 : vector<1x384xf32>
    %10 = arith.maximumf %6, %2 : vector<1x384xf32>
    %11 = arith.minimumf %7, %3 : vector<1x384xf32>
    %12 = arith.minimumf %8, %4 : vector<1x384xf32>
    %13 = arith.subf %11, %9 : vector<1x384xf32>
    %cst = arith.constant 0.000000e+00 : f32
    %14 = vector.broadcast %cst : f32 to vector<1x384xf32>
    %15 = arith.maximumf %13, %14 : vector<1x384xf32>
    %16 = arith.subf %12, %10 : vector<1x384xf32>
    %cst_1 = arith.constant 0.000000e+00 : f32
    %17 = vector.broadcast %cst_1 : f32 to vector<1x384xf32>
    %18 = arith.maximumf %16, %17 : vector<1x384xf32>
    %19 = arith.mulf %15, %18 : vector<1x384xf32>
    %20 = arith.subf %7, %5 : vector<1x384xf32>
    %21 = arith.subf %8, %6 : vector<1x384xf32>
    %22 = arith.mulf %20, %21 : vector<1x384xf32>
    %23 = arith.subf %3, %1 : vector<1x384xf32>
    %24 = arith.subf %4, %2 : vector<1x384xf32>
    %25 = arith.mulf %23, %24 : vector<1x384xf32>
    %26 = arith.addf %22, %25 : vector<1x384xf32>
    %27 = arith.subf %26, %19 : vector<1x384xf32>
    %28 = arith.divf %19, %27 : vector<1x384xf32>
    %cst_2 = arith.constant 1.000000e+00 : f32
    %29 = vector.broadcast %cst_2 : f32 to vector<1x384xf32>
    %30 = arith.subf %29, %28 : vector<1x384xf32>
    %31 = vector.shape_cast %30 : vector<1x384xf32> to vector<1x1x384xf32>
    %cst_3 = arith.constant dense<0.000000e+00> : vector<1xf32>
    %32 = vector.multi_reduction <add>, %31, %cst_3 [1, 2] : vector<1x1x384xf32> to vector<1xf32>
    %33 = vector.shape_cast %32 : vector<1xf32> to vector<1x1x1xf32>
    %34 = vector.extract %33[0, 0, 0] : f32 from vector<1x1x1xf32>
    %35 = vector.broadcast %34 : f32 to vector<1x128xf32>
    %c0_4 = arith.constant 0 : index
    %c0_5 = arith.constant 0 : index
    %36 = vector.load %arg2[%c0_4, %c0_5] : memref<1x128xf32, #tpu.memory_space<vmem>>, vector<1x128xf32>
    tpu.vector_store %arg2[%c0_4, %c0_5], %35 {strides = array<i32>} : memref<1x128xf32, #tpu.memory_space<vmem>>, vector<1x128xf32>,
    return
  }
  func.func @transform_0(%arg0: i32) -> (i32, i32) {
    %c0_i32 = arith.constant 0 : i32
    %c0_i32_0 = arith.constant 0 : i32
    return %c0_i32, %arg0 : i32, i32
  }
  func.func @transform_1(%arg0: i32) -> (i32, i32) {
    %c0_i32 = arith.constant 0 : i32
    %c0_i32_0 = arith.constant 0 : i32
    return %c0_i32, %arg0 : i32, i32
  }
}

</mosaic_0001>

<llo_original>
// kernel: _iou_loss_impl.1
$region0: #{_iou_loss_impl.1}
  #allocation0 [shape = 'u32[]', space=smem, size = 0x4, offset = 0x4, fixed_abs, tag = 'smem constant byte address 0x4 - core index']
  #allocation1 [shape = 'u32[144,128]{1,0:T(1,128)}', space=vmem, size = 0x12000, scoped, tag = 'internal scratch']
  %s0 = inlined_call_operand.vmem [shape: f32[8,384], index: 0, kind: input, shape index: {}]
  %s1 = inlined_call_operand.vmem [shape: f32[1,128], index: 1, kind: output, shape index: {}]
  %s2 = sld [smem:[#allocation0]]
  $region14: #{_iou_loss_impl.1} parent=0
    _
  %s4 = ssub.s32 1, %s2
  %s5 = scalar_select 0, %s4, %s2
  // Predicated region
  $region2: #{_iou_loss_impl.1} parent=0 // pred_check
    _
  $region3: #{_iou_loss_impl.1} parent=0 // pred_check_branch
    %7 = sbr.rel (0) target = $region5
  $region4: #{_iou_loss_impl.1} parent=0 // pred_region
    _
  $region5: #{_iou_loss_impl.1} parent=0 // pred_fallthru
    _
  %v8 = vld [vmem:[%s0] sm:$0xff]
  %v9 = vld [vmem:[%s0 + $0x8] sm:$0xff]
  %v10 = vld [vmem:[%s0 + $0x10] sm:$0xff]
  %v14 = vrot.slane %v8, 4
  %v15 = vrot.slane %v9, 4
  %v16 = vrot.slane %v10, 4
  %v20 = vmax.f32 %v8, %v14
  %v21 = vmax.f32 %v9, %v15
  %v22 = vmax.f32 %v10, %v16
  %v23 = vmin.f32 %v8, %v14
  %v24 = vmin.f32 %v9, %v15
  %v25 = vmin.f32 %v10, %v16
  %v29 = vrot.slane %v20, 6
  %v30 = vrot.slane %v21, 6
  %v31 = vrot.slane %v22, 6
  %v35 = vsub.f32 %v23, %v29
  %v36 = vsub.f32 %v24, %v30
  %v37 = vsub.f32 %v25, %v31
  %v38 = vmax.f32 %v35, 0.0
  %v39 = vmax.f32 %v36, 0.0
  %v40 = vmax.f32 %v37, 0.0
  %v44 = vrot.slane %v38, 1
  %v45 = vrot.slane %v39, 1
  %v46 = vrot.slane %v40, 1
  %v50 = vmul.f32 %v38, %v44
  %v51 = vmul.f32 %v39, %v45
  %v52 = vmul.f32 %v40, %v46
  %v53 = vrot.slane %v8, 6
  %v54 = vrot.slane %v9, 6
  %v55 = vrot.slane %v10, 6
  %v59 = vsub.f32 %v8, %v53
  %v60 = vsub.f32 %v9, %v54
  %v61 = vsub.f32 %v10, %v55
  %v65 = vrot.slane %v59, 1
  %v66 = vrot.slane %v60, 1
  %v67 = vrot.slane %v61, 1
  %v71 = vmul.f32 %v59, %v65
  %v72 = vmul.f32 %v60, %v66
  %v73 = vmul.f32 %v61, %v67
  %v77 = vrot.slane %v71, 4
  %v78 = vrot.slane %v72, 4
  %v79 = vrot.slane %v73, 4
  %v83 = vadd.f32 %v71, %v77
  %v84 = vadd.f32 %v72, %v78
  %v85 = vadd.f32 %v73, %v79
  %v86 = vsub.f32 %v83, %v50
  %v87 = vsub.f32 %v84, %v51
  %v88 = vsub.f32 %v85, %v52
  %v89 = vrcp.pop %v86
  %v90 = vmul.f32 %v50, %v89
  %v91 = vrcp.pop %v87
  %v92 = vmul.f32 %v51, %v91
  %v93 = vrcp.pop %v88
  %v94 = vmul.f32 %v52, %v93
  %v95 = vsub.f32 1.0, %v90
  %v96 = vsub.f32 1.0, %v92
  %v97 = vsub.f32 1.0, %v94
  %v101 = vrot.slane %v95, 6
  %v102 = vrot.slane %v96, 6
  %v103 = vrot.slane %v97, 6
  %vm107 = vcmask 1040384
  %v108 = vsel %vm107, %v101, 0.0
  %v109 = vsel %vm107, %v102, 0.0
  %v110 = vadd.f32 %v108, %v109
  %v111 = vsel %vm107, %v103, 0.0
  %v112 = vadd.f32 %v110, %v111
  %113 = vadd.xlane.f32.xlu0 %v112
  %v114 = vpop.xlane.xlu0 %113
  %v115 = vrot.slane %v114, 4
  %v116 = vadd.f32 %v114, %v115
  %v117 = vrot.slane %v116, 2
  %v118 = vadd.f32 %v116, %v117
  %v119 = vrot.slane %v118, 1
  %v120 = vadd.f32 %v118, %v119
  %s121 = vtos %v120
  %v122 = vstv %s121
  %123 = vst [vmem:[%s1] sm:$0x1] %v122
  // Predicated region
  $region6: #{_iou_loss_impl.1} parent=0 // pred_check
    _
  $region7: #{_iou_loss_impl.1} parent=0 // pred_check_branch
    %125 = sbr.rel (0) target = $region9
  $region8: #{_iou_loss_impl.1} parent=0 // pred_region
    _
  $region9: #{_iou_loss_impl.1} parent=0 // pred_fallthru
    _
  // Predicated region
  $region10: #{_iou_loss_impl.1} parent=0 // pred_check
    _
  $region11: #{_iou_loss_impl.1} parent=0 // pred_check_branch
    %127 = sbr.rel (0) target = $region13
  $region12: #{_iou_loss_impl.1} parent=0 // pred_region
    _
  $region13: #{_iou_loss_impl.1} parent=0 // pred_fallthru
    _

</llo_original>
